<compile_context>
chip_gen: v7x
topology: tpu7x:2x2x1
jax: 0.10.0
libtpu: 0.0.40
codegen_flags: <defaults>
</compile_context>

<pallas_src>
import jax
import jax.numpy as jnp
from jax.experimental import pallas as pl
from jax.experimental.pallas import tpu as pltpu


def _policy_mlp_kernel(x_ref, w1_ref, b1_ref, w2_ref, b2_ref, w3_ref, b3_ref, o_ref):
    # in-kernel bf16 pack of the batch tile (weights are already bf16)
    x = x_ref[...].astype(jnp.bfloat16)                                  # (TB, obs_dim)
    # l1 + tanh (f32 accumulate, f32 bias, f32 tanh)
    h1 = jnp.dot(x, w1_ref[...], preferred_element_type=jnp.float32) + b1_ref[...]
    h1 = jnp.tanh(h1)                                                    # (TB, 64) f32
    # l3 + tanh
    h2 = jnp.dot(h1.astype(jnp.bfloat16), w2_ref[...],
                 preferred_element_type=jnp.float32) + b2_ref[...]
    h2 = jnp.tanh(h2)                                                    # (TB, 64) f32
    # l5 logits head (no activation); narrow unpadded store (full last dim)
    o_ref[...] = jnp.dot(h2.astype(jnp.bfloat16), w3_ref[...],
                         preferred_element_type=jnp.float32) + b3_ref[...]


def _round_up(a, m):
    return ((a + m - 1) // m) * m


def prepare_params(params):
    """One-time parameter preparation: bf16 matmul weights, f32 biases.

    Hoisted out of policy_forward so repeated rollout calls don't pay the
    cast's HBM round-trips / launches every step.
    """
    return {
        "w1": params["w1"].astype(jnp.bfloat16),
        "w2": params["w2"].astype(jnp.bfloat16),
        "w3": params["w3"].astype(jnp.bfloat16),
        "b1": params["b1"].astype(jnp.float32),
        "b2": params["b2"].astype(jnp.float32),
        "b3": params["b3"].astype(jnp.float32),
    }


def policy_forward(x, prep, *, tb=2048):
    """x: (B, obs_dim) float32; prep: output of prepare_params()."""
    B, obs_dim = x.shape
    hidden = prep["w1"].shape[1]
    n_actions = prep["w3"].shape[1]

    # Balanced batch tile:
    #   * multiple of 16 (bf16 sublane packing),
    #   * at least 2 grid steps when the batch is big enough (v7x megacore),
    #   * sized from ceil(B / nsteps) so Bp isn't rounded up to a huge tile multiple.
    nsteps = pl.cdiv(B, tb)
    if nsteps == 1 and B >= 32:
        nsteps = 2
    TB = _round_up(max(pl.cdiv(B, nsteps), 1), 16)
    Bp = nsteps * TB

    x_p = x if Bp == B else jnp.pad(x, ((0, Bp - B), (0, 0)))

    def _full(a):
        nd = a.ndim
        return pl.BlockSpec(a.shape, lambda i, _nd=nd: (0,) * _nd)

    in_specs = [
        pl.BlockSpec((TB, obs_dim), lambda i: (i, 0)),   # x: tiled along batch (f32)
        _full(prep["w1"]), _full(prep["b1"]),            # weights/biases: VMEM-resident
        _full(prep["w2"]), _full(prep["b2"]),
        _full(prep["w3"]), _full(prep["b3"]),
    ]
    out_specs = pl.BlockSpec((TB, n_actions), lambda i: (i, 0))

    cost = pl.CostEstimate(
        flops=2 * Bp * (obs_dim * hidden + hidden * hidden + hidden * n_actions),
        transcendentals=2 * Bp * hidden,
        bytes_accessed=(Bp * obs_dim * 4
                        + prep["w1"].size * 2 + prep["w2"].size * 2 + prep["w3"].size * 2
                        + prep["b1"].size * 4 + prep["b2"].size * 4 + prep["b3"].size * 4
                        + Bp * n_actions * 4),
    )

    logits = pl.pallas_call(
        _policy_mlp_kernel,
        out_shape=jax.ShapeDtypeStruct((Bp, n_actions), jnp.float32),
        grid=(nsteps,),
        in_specs=in_specs,
        out_specs=out_specs,
        compiler_params=pltpu.CompilerParams(dimension_semantics=("parallel",)),
        cost_estimate=cost,
    )(x_p, prep["w1"], prep["b1"], prep["w2"], prep["b2"], prep["w3"], prep["b3"])

    return logits[:B] if Bp != B else logits


def init_params(key, obs_dim, hidden, n_actions):
    """Deterministic synthetic parameter init (shapes match the PyTorch module)."""
    k1, k2, k3 = jax.random.split(key, 3)
    # l1: default torch Linear init -> deterministic small values
    w1 = jax.random.normal(k1, (obs_dim, hidden), jnp.float32) / jnp.sqrt(obs_dim)
    b1 = jnp.zeros((1, hidden), jnp.float32)
    # l3: "orthogonal(std=sqrt(2))" shape-equivalent deterministic init
    w2 = jax.random.normal(k2, (hidden, hidden), jnp.float32) * (jnp.sqrt(2.0) / jnp.sqrt(hidden))
    b2 = jnp.zeros((1, hidden), jnp.float32)
    # l5: "orthogonal(std=0.01)" shape-equivalent deterministic init
    w3 = jax.random.normal(k3, (hidden, n_actions), jnp.float32) * 0.01
    b3 = jnp.zeros((1, n_actions), jnp.float32)
    return {"w1": w1, "b1": b1, "w2": w2, "b2": b2, "w3": w3, "b3": b3}


def policy_forward_ref_bf16(x, p):
    """Reference matching the kernel's mixed precision (bf16 matmul operands, f32 accum/bias/tanh)."""
    xb = x.astype(jnp.bfloat16)
    h1 = jnp.tanh(jnp.dot(xb, p["w1"].astype(jnp.bfloat16),
                          preferred_element_type=jnp.float32) + p["b1"])
    h2 = jnp.tanh(jnp.dot(h1.astype(jnp.bfloat16), p["w2"].astype(jnp.bfloat16),
                          preferred_element_type=jnp.float32) + p["b2"])
    return jnp.dot(h2.astype(jnp.bfloat16), p["w3"].astype(jnp.bfloat16),
                   preferred_element_type=jnp.float32) + p["b3"]


def policy_forward_ref_f32(x, p):
    h1 = jnp.tanh(x @ p["w1"] + p["b1"])
    h2 = jnp.tanh(h1 @ p["w2"] + p["b2"])
    return h2 @ p["w3"] + p["b3"]


if __name__ == "__main__":
    key = jax.random.PRNGKey(0)
    kx, kp = jax.random.split(key)

    batch, obs_dim, hidden, n_actions = 2, 4, 64, 6
    x = jax.random.normal(kx, (batch, obs_dim), jnp.float32)
    params = init_params(kp, obs_dim, hidden, n_actions)
    prep = prepare_params(params)   # one-time weight cast (hoisted out of the forward)

    logits = policy_forward(x, prep)
    jax.block_until_ready(logits)

    assert logits.shape == (batch, n_actions)
    # tight check vs a reference using the same bf16-operand / f32-accum math
    ref_bf16 = policy_forward_ref_bf16(x, params)
    assert jnp.allclose(logits, ref_bf16, atol=2e-3, rtol=2e-3)
    # looser sanity check vs full-f32 semantics of the original module
    ref_f32 = policy_forward_ref_f32(x, params)
    assert jnp.allclose(logits, ref_f32, atol=5e-2, rtol=5e-2)

    # TODO(synk): get_action (Categorical sample / log_prob / entropy) could be fused
    # into the kernel tail to avoid the logits writeback entirely if callers don't
    # need raw logits.
    print("KERNEL_OK")
</pallas_src>

<mosaic_0001>
module attributes {stable_mosaic.version = 11 : i64} {
  func.func @_policy_mlp_kernel(%arg0: i32, %arg1: memref<16x4xf32, #tpu.memory_space<vmem>>, %arg2: memref<4x64xbf16, #tpu.memory_space<vmem>>, %arg3: memref<1x64xf32, #tpu.memory_space<vmem>>, %arg4: memref<64x64xbf16, #tpu.memory_space<vmem>>, %arg5: memref<1x64xf32, #tpu.memory_space<vmem>>, %arg6: memref<64x6xbf16, #tpu.memory_space<vmem>>, %arg7: memref<1x6xf32, #tpu.memory_space<vmem>>, %arg8: memref<16x6xf32, #tpu.memory_space<vmem>>) attributes {dimension_semantics = [#tpu.dimension_semantics<parallel>], iteration_bounds = array<i64: 1>, scalar_prefetch = 0 : i64, scratch_operands = 0 : i64, tpu.core_type = #tpu.core_type<tc>, window_params = [{transform_indices = @transform_0, window_bounds = array<i64: 16, 4>}, {pipeline_mode = #tpu.pipeline_mode<synchronous>, transform_indices = @transform_1, window_bounds = array<i64: 4, 64>}, {pipeline_mode = #tpu.pipeline_mode<synchronous>, transform_indices = @transform_2, window_bounds = array<i64: 1, 64>}, {pipeline_mode = #tpu.pipeline_mode<synchronous>, transform_indices = @transform_3, window_bounds = array<i64: 64, 64>}, {pipeline_mode = #tpu.pipeline_mode<synchronous>, transform_indices = @transform_4, window_bounds = array<i64: 1, 64>}, {pipeline_mode = #tpu.pipeline_mode<synchronous>, transform_indices = @transform_5, window_bounds = array<i64: 64, 6>}, {pipeline_mode = #tpu.pipeline_mode<synchronous>, transform_indices = @transform_6, window_bounds = array<i64: 1, 6>}, {transform_indices = @transform_7, window_bounds = array<i64: 16, 6>}]} {
    %c0 = arith.constant 0 : index
    %c0_0 = arith.constant 0 : index
    %0 = vector.load %arg1[%c0, %c0_0] : memref<16x4xf32, #tpu.memory_space<vmem>>, vector<16x4xf32>
    %1 = arith.truncf %0 : vector<16x4xf32> to vector<16x4xbf16>
    %c0_1 = arith.constant 0 : index
    %c0_2 = arith.constant 0 : index
    %2 = vector.load %arg2[%c0_1, %c0_2] : memref<4x64xbf16, #tpu.memory_space<vmem>>, vector<4x64xbf16>
    %cst = arith.constant dense<0.000000e+00> : vector<16x64xf32>
    %3 = tpu.matmul %1, %2, %cst {dimension_numbers = #tpu.dot_dimension_numbers<[1], [0], [0], [1], [0, 0, 1, 1], [], []>} : vector<16x4xbf16>, vector<4x64xbf16>, vector<16x64xf32> -> vector<16x64xf32>
    %c0_3 = arith.constant 0 : index
    %c0_4 = arith.constant 0 : index
    %4 = vector.load %arg3[%c0_3, %c0_4] : memref<1x64xf32, #tpu.memory_space<vmem>>, vector<1x64xf32>
    %5 = vector.broadcast %4 : vector<1x64xf32> to vector<16x64xf32>
    %6 = arith.addf %3, %5 : vector<16x64xf32>
    %7 = math.tanh %6 : vector<16x64xf32>
    %8 = arith.truncf %7 : vector<16x64xf32> to vector<16x64xbf16>
    %c0_5 = arith.constant 0 : index
    %c0_6 = arith.constant 0 : index
    %9 = vector.load %arg4[%c0_5, %c0_6] : memref<64x64xbf16, #tpu.memory_space<vmem>>, vector<64x64xbf16>
    %cst_7 = arith.constant dense<0.000000e+00> : vector<16x64xf32>
    %10 = tpu.matmul %8, %9, %cst_7 {dimension_numbers = #tpu.dot_dimension_numbers<[1], [0], [0], [1], [0, 0, 1, 1], [], []>} : vector<16x64xbf16>, vector<64x64xbf16>, vector<16x64xf32> -> vector<16x64xf32>
    %c0_8 = arith.constant 0 : index
    %c0_9 = arith.constant 0 : index
    %11 = vector.load %arg5[%c0_8, %c0_9] : memref<1x64xf32, #tpu.memory_space<vmem>>, vector<1x64xf32>
    %12 = vector.broadcast %11 : vector<1x64xf32> to vector<16x64xf32>
    %13 = arith.addf %10, %12 : vector<16x64xf32>
    %14 = math.tanh %13 : vector<16x64xf32>
    %15 = arith.truncf %14 : vector<16x64xf32> to vector<16x64xbf16>
    %c0_10 = arith.constant 0 : index
    %c0_11 = arith.constant 0 : index
    %16 = vector.load %arg6[%c0_10, %c0_11] : memref<64x6xbf16, #tpu.memory_space<vmem>>, vector<64x6xbf16>
    %cst_12 = arith.constant dense<0.000000e+00> : vector<16x6xf32>
    %17 = tpu.matmul %15, %16, %cst_12 {dimension_numbers = #tpu.dot_dimension_numbers<[1], [0], [0], [1], [0, 0, 1, 1], [], []>} : vector<16x64xbf16>, vector<64x6xbf16>, vector<16x6xf32> -> vector<16x6xf32>
    %c0_13 = arith.constant 0 : index
    %c0_14 = arith.constant 0 : index
    %18 = vector.load %arg7[%c0_13, %c0_14] : memref<1x6xf32, #tpu.memory_space<vmem>>, vector<1x6xf32>
    %19 = vector.broadcast %18 : vector<1x6xf32> to vector<16x6xf32>
    %20 = arith.addf %17, %19 : vector<16x6xf32>
    %c0_15 = arith.constant 0 : index
    %c0_16 = arith.constant 0 : index
    %21 = vector.load %arg8[%c0_15, %c0_16] : memref<16x6xf32, #tpu.memory_space<vmem>>, vector<16x6xf32>
    tpu.vector_store %arg8[%c0_15, %c0_16], %20 {strides = array<i32>} : memref<16x6xf32, #tpu.memory_space<vmem>>, vector<16x6xf32>,
    return
  }
  func.func @transform_0(%arg0: i32) -> (i32, i32) {
    %c0_i32 = arith.constant 0 : i32
    %c0_i32_0 = arith.constant 0 : i32
    return %arg0, %c0_i32 : i32, i32
  }
  func.func @transform_1(%arg0: i32) -> (i32, i32) {
    %c0_i32 = arith.constant 0 : i32
    %c0_i32_0 = arith.constant 0 : i32
    %c0_i32_1 = arith.constant 0 : i32
    return %c0_i32, %c0_i32_0 : i32, i32
  }
  func.func @transform_2(%arg0: i32) -> (i32, i32) {
    %c0_i32 = arith.constant 0 : i32
    %c0_i32_0 = arith.constant 0 : i32
    %c0_i32_1 = arith.constant 0 : i32
    return %c0_i32, %c0_i32_0 : i32, i32
  }
  func.func @transform_3(%arg0: i32) -> (i32, i32) {
    %c0_i32 = arith.constant 0 : i32
    %c0_i32_0 = arith.constant 0 : i32
    %c0_i32_1 = arith.constant 0 : i32
    return %c0_i32, %c0_i32_0 : i32, i32
  }
  func.func @transform_4(%arg0: i32) -> (i32, i32) {
    %c0_i32 = arith.constant 0 : i32
    %c0_i32_0 = arith.constant 0 : i32
    %c0_i32_1 = arith.constant 0 : i32
    return %c0_i32, %c0_i32_0 : i32, i32
  }
  func.func @transform_5(%arg0: i32) -> (i32, i32) {
    %c0_i32 = arith.constant 0 : i32
    %c0_i32_0 = arith.constant 0 : i32
    %c0_i32_1 = arith.constant 0 : i32
    return %c0_i32, %c0_i32_0 : i32, i32
  }
  func.func @transform_6(%arg0: i32) -> (i32, i32) {
    %c0_i32 = arith.constant 0 : i32
    %c0_i32_0 = arith.constant 0 : i32
    %c0_i32_1 = arith.constant 0 : i32
    return %c0_i32, %c0_i32_0 : i32, i32
  }
  func.func @transform_7(%arg0: i32) -> (i32, i32) {
    %c0_i32 = arith.constant 0 : i32
    %c0_i32_0 = arith.constant 0 : i32
    return %arg0, %c0_i32 : i32, i32
  }
}

</mosaic_0001>

<llo_original>
// kernel: tpu_custom_call.1
$region0: #{tpu_custom_call.1}
  #allocation0 [shape = 'u32[]', space=smem, size = 0x4, offset = 0x4, fixed_abs, tag = 'smem constant byte address 0x4 - core index']
  #allocation1 [shape = 'u32[144,128]{1,0:T(1,128)}', space=vmem, size = 0x12000, scoped, tag = 'internal scratch']
  %s0 = inlined_call_operand.vmem [shape: f32[16,4], index: 0, kind: input, shape index: {}]
  %s1 = inlined_call_operand.vmem [shape: bf16[4,64], index: 1, kind: input, shape index: {}]
  %s2 = inlined_call_operand.vmem [shape: f32[1,64], index: 2, kind: input, shape index: {}]
  %s3 = inlined_call_operand.vmem [shape: bf16[64,64], index: 3, kind: input, shape index: {}]
  %s4 = inlined_call_operand.vmem [shape: f32[1,64], index: 4, kind: input, shape index: {}]
  %s5 = inlined_call_operand.vmem [shape: bf16[64,6], index: 5, kind: input, shape index: {}]
  %s6 = inlined_call_operand.vmem [shape: f32[1,6], index: 6, kind: input, shape index: {}]
  %s7 = inlined_call_operand.vmem [shape: f32[16,6], index: 7, kind: output, shape index: {}]
  %s8 = sld [smem:[#allocation0]]
  $region38: #{tpu_custom_call.1} parent=0
    _
  %s10 = ssub.s32 1, %s8
  %s11 = scalar_select 0, %s10, %s8
  // Predicated region
  $region2: #{tpu_custom_call.1} parent=0 // pred_check
    _
  $region3: #{tpu_custom_call.1} parent=0 // pred_check_branch
    %13 = sbr.rel (0) target = $region5
  $region4: #{tpu_custom_call.1} parent=0 // pred_region
    _
  $region5: #{tpu_custom_call.1} parent=0 // pred_fallthru
    _
  // Predicated region
  $region6: #{tpu_custom_call.1} parent=0 // pred_check
    _
  $region7: #{tpu_custom_call.1} parent=0 // pred_check_branch
    %15 = sbr.rel (0) target = $region9
  $region8: #{tpu_custom_call.1} parent=0 // pred_region
    _
  $region9: #{tpu_custom_call.1} parent=0 // pred_fallthru
    _
  // Predicated region
  $region10: #{tpu_custom_call.1} parent=0 // pred_check
    _
  $region11: #{tpu_custom_call.1} parent=0 // pred_check_branch
    %17 = sbr.rel (0) target = $region13
  $region12: #{tpu_custom_call.1} parent=0 // pred_region
    _
  $region13: #{tpu_custom_call.1} parent=0 // pred_fallthru
    _
  // Predicated region
  $region14: #{tpu_custom_call.1} parent=0 // pred_check
    _
  $region15: #{tpu_custom_call.1} parent=0 // pred_check_branch
    %19 = sbr.rel (0) target = $region17
  $region16: #{tpu_custom_call.1} parent=0 // pred_region
    _
  $region17: #{tpu_custom_call.1} parent=0 // pred_fallthru
    _
  // Predicated region
  $region18: #{tpu_custom_call.1} parent=0 // pred_check
    _
  $region19: #{tpu_custom_call.1} parent=0 // pred_check_branch
    %21 = sbr.rel (0) target = $region21
  $region20: #{tpu_custom_call.1} parent=0 // pred_region
    _
  $region21: #{tpu_custom_call.1} parent=0 // pred_fallthru
    _
  // Predicated region
  $region22: #{tpu_custom_call.1} parent=0 // pred_check
    _
  $region23: #{tpu_custom_call.1} parent=0 // pred_check_branch
    %23 = sbr.rel (0) target = $region25
  $region24: #{tpu_custom_call.1} parent=0 // pred_region
    _
  $region25: #{tpu_custom_call.1} parent=0 // pred_fallthru
    _
  // Predicated region
  $region26: #{tpu_custom_call.1} parent=0 // pred_check
    _
  $region27: #{tpu_custom_call.1} parent=0 // pred_check_branch
    %25 = sbr.rel (0) target = $region29
  $region28: #{tpu_custom_call.1} parent=0 // pred_region
    _
  $region29: #{tpu_custom_call.1} parent=0 // pred_fallthru
    _
  %v27 = vld [vmem:[%s0] sm:$0xff]
  %v28 = vld [vmem:[%s0 + $0x8] sm:$0xff]
  %v29 = vpack.c.bf16 %v28, %v27
  %v30 = vld [vmem:[%s1] sm:$0x3]
  %v31 = vld [vmem:[%s2] sm:$0x1]
  %v33 = vlaneseq
  %v34 = vshrl.u32 %v33, 7
  %v35 = vsub.s32 0, %v34
  %v36 = vrot.slane %v31, %v35
  %vm38 = vcmask 31744
  %v40 = vsel %vm38, %v29, 0
  %vm42 = vcmask 1041408
  %v44 = vsel %vm42, %v30, 0
  %46 = vmatprep.subr.bf16.mxu0 0
  %47 = vmatpush1.bf16.msra.mxu0 %v44
  %48 = vmatprep.subr.bf16.mxu0 0
  %49 = vmatpush1.bf16.msra.mxu0 0
  %50 = vmatprep.subr.bf16.mxu0 0
  %51 = vmatpush1.bf16.msra.mxu0 0
  %52 = vmatprep.subr.bf16.mxu0 0
  %53 = vmatpush1.bf16.msra.mxu0 0
  %54 = vmatprep.subr.bf16.mxu0 0
  %55 = vmatpush1.bf16.msra.mxu0 0
  %56 = vmatprep.subr.bf16.mxu0 0
  %57 = vmatpush1.bf16.msra.mxu0 0
  %58 = vmatprep.subr.bf16.mxu0 0
  %59 = vmatpush1.bf16.msra.mxu0 0
  %60 = vmatprep.subr.bf16.mxu0 0
  %61 = vmatpush1.bf16.msra.mxu0 0
  %62 = vmatprep.subr.bf16.mxu0 0
  %63 = vmatpush1.bf16.msra.mxu0 0
  %64 = vmatprep.subr.bf16.mxu0 0
  %65 = vmatpush1.bf16.msra.mxu0 0
  %66 = vmatprep.subr.bf16.mxu0 0
  %67 = vmatpush1.bf16.msra.mxu0 0
  %68 = vmatprep.subr.bf16.mxu0 0
  %69 = vmatpush1.bf16.msra.mxu0 0
  %70 = vmatprep.subr.bf16.mxu0 0
  %71 = vmatpush1.bf16.msra.mxu0 0
  %72 = vmatprep.subr.bf16.mxu0 0
  %73 = vmatpush1.bf16.msra.mxu0 0
  %74 = vmatprep.subr.bf16.mxu0 0
  %75 = vmatpush1.bf16.msra.mxu0 0
  %76 = vmatprep.subr.bf16.mxu0 0
  %77 = vmatpush1.bf16.msra.mxu0 0
  %78 = vmatprep.mubr.bf16.mxu0 0
  %79 = vmatmul.mubr.bf16.gmra.mrb[0].mxu0 %v40
  %v80 = vpop.f32.mrb[0].mxu0
  %v81 = vadd.f32 %v36, %v80
  %v82 = vpop.f32.mrb[0].mxu0
  %v83 = vpop.f32.mrb[0].mxu0
  %v84 = vadd.f32 %v36, %v83
  %v85 = vpop.f32.mrb[0].mxu0
  %86 = vdwg.mxu0
  %v87 = vtanh.pop %v81
  %v88 = vtanh.pop %v84
  %v89 = vpack.c.bf16 %v88, %v87
  %v90 = vld [vmem:[%s3] sm:$0xf]
  %v91 = vld [vmem:[%s3 + $0x4] sm:$0xf]
  %v92 = vld [vmem:[%s3 + $0x8] sm:$0xf]
  %v93 = vld [vmem:[%s3 + $0xc] sm:$0xf]
  %v94 = vld [vmem:[%s3 + $0x10] sm:$0xf]
  %v95 = vld [vmem:[%s3 + $0x14] sm:$0xf]
  %v96 = vld [vmem:[%s3 + $0x18] sm:$0xf]
  %v97 = vld [vmem:[%s3 + $0x1c] sm:$0xf]
  %v98 = vld [vmem:[%s4] sm:$0x1]
  %v100 = vlaneseq
  %v101 = vshrl.u32 %v100, 7
  %v102 = vsub.s32 0, %v101
  %v103 = vrot.slane %v98, %v102
  %v113 = vunpack.c.l.b16 %v90
  %v114 = vunpack.c.l.b16 %v91
  %v115 = vunpack.c.l.b16 %v92
  %v116 = vunpack.c.l.b16 %v93
  %v117 = vunpack.c.l.b16 %v94
  %v118 = vunpack.c.l.b16 %v95
  %v119 = vunpack.c.l.b16 %v96
  %v120 = vunpack.c.l.b16 %v97
  %v121 = vpack.c.b16 %v114, %v113
  %v122 = vpack.c.b16 %v116, %v115
  %v123 = vpack.c.b16 %v118, %v117
  %v124 = vpack.c.b16 %v120, %v119
  %vm129 = vcmask 523264
  %v131 = vsel %vm129, %v89, 0
  %133 = vmatprep.subr.bf16.mxu0 0
  %134 = vmatpush1.bf16.msra.mxu0 %v121
  %135 = vmatprep.subr.bf16.mxu0 0
  %136 = vmatpush1.bf16.msra.mxu0 %v122
  %137 = vmatprep.subr.bf16.mxu0 0
  %138 = vmatpush1.bf16.msra.mxu0 %v123
  %139 = vmatprep.subr.bf16.mxu0 0
  %140 = vmatpush1.bf16.msra.mxu0 %v124
  %141 = vmatprep.subr.bf16.mxu0 0
  %142 = vmatpush1.bf16.msra.mxu0 0
  %143 = vmatprep.subr.bf16.mxu0 0
  %144 = vmatpush1.bf16.msra.mxu0 0
  %145 = vmatprep.subr.bf16.mxu0 0
  %146 = vmatpush1.bf16.msra.mxu0 0
  %147 = vmatprep.subr.bf16.mxu0 0
  %148 = vmatpush1.bf16.msra.mxu0 0
  %149 = vmatprep.subr.bf16.mxu0 0
  %150 = vmatpush1.bf16.msra.mxu0 0
  %151 = vmatprep.subr.bf16.mxu0 0
  %152 = vmatpush1.bf16.msra.mxu0 0
  %153 = vmatprep.subr.bf16.mxu0 0
  %154 = vmatpush1.bf16.msra.mxu0 0
  %155 = vmatprep.subr.bf16.mxu0 0
  %156 = vmatpush1.bf16.msra.mxu0 0
  %157 = vmatprep.subr.bf16.mxu0 0
  %158 = vmatpush1.bf16.msra.mxu0 0
  %159 = vmatprep.subr.bf16.mxu0 0
  %160 = vmatpush1.bf16.msra.mxu0 0
  %161 = vmatprep.subr.bf16.mxu0 0
  %162 = vmatpush1.bf16.msra.mxu0 0
  %163 = vmatprep.subr.bf16.mxu0 0
  %164 = vmatpush1.bf16.msra.mxu0 0
  %165 = vmatprep.mubr.bf16.mxu0 0
  %166 = vmatmul.mubr.bf16.gmra.mrb[0].mxu0 %v131
  %v167 = vpop.f32.mrb[0].mxu0
  %v168 = vadd.f32 %v103, %v167
  %v169 = vpop.f32.mrb[0].mxu0
  %v170 = vpop.f32.mrb[0].mxu0
  %v171 = vadd.f32 %v103, %v170
  %v172 = vpop.f32.mrb[0].mxu0
  %173 = vdwg.mxu0
  %v174 = vtanh.pop %v168
  %v175 = vtanh.pop %v171
  %v176 = vpack.c.bf16 %v175, %v174
  %v177 = vld [vmem:[%s5] sm:$0xf]
  %v178 = vld [vmem:[%s5 + $0x4] sm:$0xf]
  %v179 = vld [vmem:[%s5 + $0x8] sm:$0xf]
  %v180 = vld [vmem:[%s5 + $0xc] sm:$0xf]
  %v181 = vld [vmem:[%s5 + $0x10] sm:$0xf]
  %v182 = vld [vmem:[%s5 + $0x14] sm:$0xf]
  %v183 = vld [vmem:[%s5 + $0x18] sm:$0xf]
  %v184 = vld [vmem:[%s5 + $0x1c] sm:$0xf]
  %v185 = vld [vmem:[%s6] sm:$0x1]
  %v187 = vlaneseq
  %v188 = vshrl.u32 %v187, 7
  %v189 = vsub.s32 0, %v188
  %v190 = vrot.slane %v185, %v189
  %v200 = vunpack.c.l.b16 %v177
  %v201 = vunpack.c.l.b16 %v178
  %v202 = vunpack.c.l.b16 %v179
  %v203 = vunpack.c.l.b16 %v180
  %v204 = vunpack.c.l.b16 %v181
  %v205 = vunpack.c.l.b16 %v182
  %v206 = vunpack.c.l.b16 %v183
  %v207 = vunpack.c.l.b16 %v184
  %v208 = vpack.c.b16 %v201, %v200
  %v209 = vpack.c.b16 %v203, %v202
  %v210 = vpack.c.b16 %v205, %v204
  %v211 = vpack.c.b16 %v207, %v206
  %v217 = vsel %vm129, %v176, 0
  %219 = vmatprep.subr.bf16.mxu0 0
  %220 = vmatpush1.bf16.msra.mxu0 %v208
  %221 = vmatprep.subr.bf16.mxu0 0
  %222 = vmatpush1.bf16.msra.mxu0 %v209
  %223 = vmatprep.subr.bf16.mxu0 0
  %224 = vmatpush1.bf16.msra.mxu0 %v210
  %225 = vmatprep.subr.bf16.mxu0 0
  %226 = vmatpush1.bf16.msra.mxu0 %v211
  %227 = vmatprep.subr.bf16.mxu0 0
  %228 = vmatpush1.bf16.msra.mxu0 0
  %229 = vmatprep.subr.bf16.mxu0 0
  %230 = vmatpush1.bf16.msra.mxu0 0
  %231 = vmatprep.subr.bf16.mxu0 0
  %232 = vmatpush1.bf16.msra.mxu0 0
  %233 = vmatprep.subr.bf16.mxu0 0
  %234 = vmatpush1.bf16.msra.mxu0 0
  %235 = vmatprep.subr.bf16.mxu0 0
  %236 = vmatpush1.bf16.msra.mxu0 0
  %237 = vmatprep.subr.bf16.mxu0 0
  %238 = vmatpush1.bf16.msra.mxu0 0
  %239 = vmatprep.subr.bf16.mxu0 0
  %240 = vmatpush1.bf16.msra.mxu0 0
  %241 = vmatprep.subr.bf16.mxu0 0
  %242 = vmatpush1.bf16.msra.mxu0 0
  %243 = vmatprep.subr.bf16.mxu0 0
  %244 = vmatpush1.bf16.msra.mxu0 0
  %245 = vmatprep.subr.bf16.mxu0 0
  %246 = vmatpush1.bf16.msra.mxu0 0
  %247 = vmatprep.subr.bf16.mxu0 0
  %248 = vmatpush1.bf16.msra.mxu0 0
  %249 = vmatprep.subr.bf16.mxu0 0
  %250 = vmatpush1.bf16.msra.mxu0 0
  %251 = vmatprep.mubr.bf16.mxu0 0
  %252 = vmatmul.mubr.bf16.gmra.mrb[0].mxu0 %v217
  %v253 = vpop.f32.mrb[0].mxu0
  %v254 = vadd.f32 %v190, %v253
  %v255 = vpop.f32.mrb[0].mxu0
  %v256 = vpop.f32.mrb[0].mxu0
  %v257 = vadd.f32 %v190, %v256
  %v258 = vpop.f32.mrb[0].mxu0
  %259 = vdwg.mxu0
  %vm260 = vcmask 48128
  %261 = vst.msk [vmem:[%s7] sm:$0xff] %vm260, %v254
  %262 = vst.msk [vmem:[%s7 + $0x8] sm:$0xff] %vm260, %v257
  // Predicated region
  $region30: #{tpu_custom_call.1} parent=0 // pred_check
    _
  $region31: #{tpu_custom_call.1} parent=0 // pred_check_branch
    %264 = sbr.rel (0) target = $region33
  $region32: #{tpu_custom_call.1} parent=0 // pred_region
    _
  $region33: #{tpu_custom_call.1} parent=0 // pred_fallthru
    _
  // Predicated region
  $region34: #{tpu_custom_call.1} parent=0 // pred_check
    _
  $region35: #{tpu_custom_call.1} parent=0 // pred_check_branch
    %266 = sbr.rel (0) target = $region37
  $region36: #{tpu_custom_call.1} parent=0 // pred_region
    _
  $region37: #{tpu_custom_call.1} parent=0 // pred_fallthru
    _

</llo_original>
